<compile_context>
chip_gen: v7x
topology: tpu7x:2x2x1
jax: 0.10.0
libtpu: 0.0.40
codegen_flags: <defaults>
</compile_context>

<pallas_src>
import functools

import jax
import jax.numpy as jnp
from jax.experimental import pallas as pl
from jax.experimental.pallas import tpu as pltpu

TM = 256     # destination-node tile (rows); clamped for tiny graphs
TK = 256     # edge tile (sparse reduction axis); clamped for tiny graphs
LANE = 128   # hidden dim padded to this for lane-dense output stores


# ----------------------------------------------------------------------------
# helpers
# ----------------------------------------------------------------------------
def _round_up(x, m):
    return ((x + m - 1) // m) * m


def _tile(n, t):
    """Tile size: t for large extents, else the 8-aligned full extent."""
    return t if n > t else _round_up(n, 8)


def _pad_rows(x, rows):
    r = x.shape[0]
    if r == rows:
        return x
    return jnp.zeros((rows,) + x.shape[1:], x.dtype).at[:r].set(x)


def _pad_cols(x, cols, dtype):
    r, c = x.shape
    return jnp.zeros((r, cols), dtype).at[:, :c].set(x.astype(dtype))


# ----------------------------------------------------------------------------
# Stage 1: per-edge message kernel (hoisted out of the node-tile grid)
#   msg[e] = (xs[e] @ W_msg + ea[e] @ W_edge) * w[e]       -> bf16 [Ep, Hp]
# ----------------------------------------------------------------------------
def _msg_kernel(xs_ref, ea_ref, w_ref, wm_ref, we_ref, o_ref):
    m = jnp.dot(xs_ref[...], wm_ref[...], preferred_element_type=jnp.float32)
    m = m + jnp.dot(ea_ref[...], we_ref[...], preferred_element_type=jnp.float32)
    o_ref[...] = (m * w_ref[...]).astype(o_ref.dtype)


def compute_messages(xs, ea, w, w_msg, w_edge, *, tk):
    ep, fs = xs.shape
    fe = ea.shape[1]
    hp = w_msg.shape[1]
    flops = 2 * ep * (fs + fe) * hp
    bytes_acc = 2 * ep * (fs + fe) + 4 * ep + 2 * (fs + fe) * hp + 2 * ep * hp
    return pl.pallas_call(
        _msg_kernel,
        out_shape=jax.ShapeDtypeStruct((ep, hp), jnp.bfloat16),
        grid=(ep // tk,),
        in_specs=[
            pl.BlockSpec((tk, fs), lambda k: (k, 0)),   # gathered src features
            pl.BlockSpec((tk, fe), lambda k: (k, 0)),   # edge attributes
            pl.BlockSpec((tk, 1), lambda k: (k, 0)),    # norm/deg weights (f32)
            pl.BlockSpec((fs, hp), lambda k: (0, 0)),   # W_msg (resident)
            pl.BlockSpec((fe, hp), lambda k: (0, 0)),   # W_edge (resident)
        ],
        out_specs=pl.BlockSpec((tk, hp), lambda k: (k, 0)),
        compiler_params=pltpu.CompilerParams(dimension_semantics=("parallel",)),
        cost_estimate=pl.CostEstimate(flops=flops, transcendentals=0,
                                      bytes_accessed=bytes_acc),
    )(xs, ea, w, w_msg, w_edge)


# ----------------------------------------------------------------------------
# Stage 2: sparse (edge-sorted) aggregation + root + bias, accumulated into the
# group-mean running output.  grid = (node tiles, max edge-blocks per tile);
# the edge axis index_map is data-dependent via scalar prefetch.
# ----------------------------------------------------------------------------
def _agg_kernel(scale, tm, start_blk_ref, nblk_ref, dst_ref, msg_ref, xd_ref,
                wroot_ref, b_ref, accin_ref, o_ref):
    i = pl.program_id(0)
    k = pl.program_id(1)

    @pl.when(k == 0)
    def _():
        root = jnp.dot(xd_ref[...], wroot_ref[...],
                       preferred_element_type=jnp.float32)
        o_ref[...] = accin_ref[...] + scale * (root + b_ref[...])

    @pl.when(k < nblk_ref[i])
    def _():
        # one-hot (dst == row) built on the VPU; edges of other tiles / padding
        # (dst = -1 sentinel) contribute exactly zero.
        row_ids = i * tm + jax.lax.broadcasted_iota(jnp.int32, (tm, 1), 0)
        onehot = (row_ids == dst_ref[...]).astype(jnp.bfloat16)   # (tm, tk)
        o_ref[...] += scale * jnp.dot(onehot, msg_ref[...],
                                      preferred_element_type=jnp.float32)


def edge_conv_accumulate(acc, dst_row, msg, x_dst, w_root, bias, start_blk,
                         nblk, scale, *, tm, tk, max_nblk):
    """acc     : [Ndp, Hp] f32  running group accumulator
       dst_row : [1, Ep]   int32 sorted destination ids (-1 = padding)
       msg     : [Ep, Hp]  bf16  weighted per-edge messages (dst-sorted)
       x_dst   : [Ndp, Fd] bf16, w_root: [Fd, Hp] bf16, bias: [1, Hp] f32
       start_blk / nblk : [n_i] int32 per-node-tile edge-block ranges."""
    ndp, hp = acc.shape
    fd = x_dst.shape[1]
    ep = msg.shape[0]
    n_i = ndp // tm

    def edge_blk(i, k, sb, nb):
        # clamp so skipped steps re-fetch a valid block (compute is pl.when-gated)
        return sb[i] + jnp.minimum(k, jnp.maximum(nb[i] - 1, 0))

    flops = 2 * ndp * fd * hp + 2 * tm * tk * hp * n_i * max_nblk
    bytes_acc = (2 * ep * hp + 4 * ep + 2 * ndp * fd + 2 * fd * hp + 4 * hp
                 + 3 * 4 * ndp * hp)

    kernel = functools.partial(_agg_kernel, scale, tm)
    return pl.pallas_call(
        kernel,
        out_shape=jax.ShapeDtypeStruct((ndp, hp), jnp.float32),
        grid_spec=pltpu.PrefetchScalarGridSpec(
            num_scalar_prefetch=2,
            grid=(n_i, max_nblk),
            in_specs=[
                pl.BlockSpec((1, tk),
                             lambda i, k, sb, nb: (0, edge_blk(i, k, sb, nb))),
                pl.BlockSpec((tk, hp),
                             lambda i, k, sb, nb: (edge_blk(i, k, sb, nb), 0)),
                pl.BlockSpec((tm, fd), lambda i, k, sb, nb: (i, 0)),   # x_dst
                pl.BlockSpec((fd, hp), lambda i, k, sb, nb: (0, 0)),   # W_root
                pl.BlockSpec((1, hp), lambda i, k, sb, nb: (0, 0)),    # bias
                pl.BlockSpec((tm, hp), lambda i, k, sb, nb: (i, 0)),   # acc in
            ],
            out_specs=pl.BlockSpec((tm, hp), lambda i, k, sb, nb: (i, 0)),
        ),
        compiler_params=pltpu.CompilerParams(
            dimension_semantics=("parallel", "arbitrary")),
        cost_estimate=pl.CostEstimate(flops=flops, transcendentals=0,
                                      bytes_accessed=bytes_acc),
    )(start_blk, nblk, dst_row, msg, x_dst, w_root, bias, acc)


# ----------------------------------------------------------------------------
# Model
# ----------------------------------------------------------------------------
class HeteroConv:
    """JAX/Pallas re-implementation of the HeteroConv forward pass."""

    def __init__(self, key, feat_dims, edge_dim, hidden, conv_sequence,
                 sync_conv=False):
        self.conv_sequence = conv_sequence
        self.sync_conv = sync_conv
        self.hidden = hidden
        self.hp = _round_up(hidden, LANE)
        self.convs = {}
        for group_ in conv_sequence:
            for conv in group_:
                src, dst = conv.split('_')
                key, k1, k2, k3 = jax.random.split(key, 4)
                fs, fd = feat_dims[src], feat_dims[dst]
                w_msg = 0.1 * jax.random.normal(k1, (fs, hidden), jnp.float32)
                w_edge = 0.1 * jax.random.normal(k2, (edge_dim, hidden), jnp.float32)
                w_root = 0.1 * jax.random.normal(k3, (fd, hidden), jnp.float32)
                b = jnp.zeros((hidden,), jnp.float32)
                self.convs[conv] = dict(
                    w_msg=w_msg, w_edge=w_edge, w_root=w_root, b=b,
                    # kernel-ready params: hidden padded to 128 lanes (bf16 MXU
                    # operands); contraction dims (fs/fd/edge_dim) left unpadded.
                    wm_p=_pad_cols(w_msg, self.hp, jnp.bfloat16),
                    we_p=_pad_cols(w_edge, self.hp, jnp.bfloat16),
                    wroot_p=_pad_cols(w_root, self.hp, jnp.bfloat16),
                    b_p=_pad_cols(b.reshape(1, hidden), self.hp, jnp.float32),
                )

    def forward(self, x_dict, batch_dict, edge_index_dict, edge_attr_dict,
                norm_dict):
        x_dict = dict(x_dict)
        new_dict = {}
        for conv_group in self.conv_sequence:
            dst = conv_group[0].split('_')[1]
            nd = x_dict[dst].shape[0]
            tm = _tile(nd, TM)
            ndp = _round_up(nd, tm)
            n_i = ndp // tm
            scale = 1.0 / len(conv_group)                 # group(..., 'mean')
            xd_p = _pad_rows(x_dict[dst].astype(jnp.bfloat16), ndp)
            acc = jnp.zeros((ndp, self.hp), jnp.float32)  # running group accumulator
            # TODO(synk): fuse all convs of a group into one pallas_call to avoid
            # re-reading/re-writing the accumulator per conv.
            for conv in conv_group:
                src, dst = conv.split('_')
                ei = edge_index_dict[(src, 'to', dst)]
                ea = edge_attr_dict[(src, 'to', dst)]
                nrm = norm_dict[(src, 'to', dst)]
                p = self.convs[conv]
                _ = batch_dict[dst]
                # TODO(synk): batch-conditional behaviour of the wrapped conv is
                # unspecified in the reference module; batch_dict is unused.

                e = ei.shape[1]
                src_idx = ei[0]
                dst_idx = ei[1].astype(jnp.int32)

                # mean aggregation weights: norm_e / deg(dst_e)
                deg = jax.ops.segment_sum(jnp.ones((e,), jnp.float32), dst_idx,
                                          num_segments=nd)
                deg = jnp.maximum(deg, 1.0)
                w_e = (jnp.ones((e,), jnp.float32) if nrm is None
                       else nrm.astype(jnp.float32)) / deg[dst_idx]

                # sort edges by destination so each node tile owns a contiguous
                # slice of edge blocks (sparse aggregation, no dense A matrix).
                order = jnp.argsort(dst_idx)
                dst_s = dst_idx[order]
                # TODO(synk): do this row gather in-kernel (manual DMA driven by
                # prefetched edge ids) instead of an XLA gather in glue.
                xs_s = x_dict[src][src_idx[order]]
                ea_s = ea[order]
                w_s = w_e[order]

                tk = _tile(e, TK)
                ep = _round_up(e, tk)
                n_blk = ep // tk

                xs_p = _pad_rows(xs_s.astype(jnp.bfloat16), ep)
                ea_p = _pad_rows(ea_s.astype(jnp.bfloat16), ep)
                w_p = _pad_rows(w_s[:, None], ep)
                dst_row = jnp.full((1, ep), -1, jnp.int32).at[0, :e].set(dst_s)

                # hoisted per-edge message matmul (computed once, not per tile)
                msg = compute_messages(xs_p, ea_p, w_p, p['wm_p'], p['we_p'],
                                       tk=tk)

                # per-node-tile contiguous edge-block ranges (scalar prefetch)
                bounds = jnp.searchsorted(
                    dst_s,
                    jnp.arange(n_i + 1, dtype=jnp.int32) * tm).astype(jnp.int32)
                row_start, row_end = bounds[:-1], bounds[1:]
                start_blk = jnp.minimum(row_start // tk, n_blk - 1).astype(jnp.int32)
                nblk = jnp.where(row_end > row_start,
                                 (row_end - 1) // tk - row_start // tk + 1,
                                 0).astype(jnp.int32)
                max_nblk = max(int(jnp.max(nblk)), 1)

                acc = edge_conv_accumulate(acc, dst_row, msg, xd_p,
                                           p['wroot_p'], p['b_p'],
                                           start_blk, nblk, scale,
                                           tm=tm, tk=tk, max_nblk=max_nblk)
            grouped = acc[:nd, :self.hidden]
            if self.sync_conv:
                new_dict[dst] = grouped
            else:
                x_dict[dst] = grouped
        return new_dict if self.sync_conv else x_dict


# ----------------------------------------------------------------------------
# Pure-jnp reference (optionally emulating the kernel's bf16 numerics)
# ----------------------------------------------------------------------------
def _forward_reference(model, x_dict, edge_index_dict, edge_attr_dict,
                       norm_dict, emulate_bf16=False):
    def q(x):
        return x.astype(jnp.bfloat16).astype(jnp.float32) if emulate_bf16 else x

    xr = dict(x_dict)
    new_dict = {}
    for conv_group in model.conv_sequence:
        results = []
        dst = conv_group[0].split('_')[1]
        for conv in conv_group:
            src, dst = conv.split('_')
            ei = edge_index_dict[(src, 'to', dst)]
            ea = edge_attr_dict[(src, 'to', dst)]
            nrm = norm_dict[(src, 'to', dst)]
            p = model.convs[conv]
            nd = xr[dst].shape[0]
            e = ei.shape[1]
            src_idx, dst_idx = ei[0], ei[1]
            deg = jax.ops.segment_sum(jnp.ones((e,), jnp.float32), dst_idx,
                                      num_segments=nd)
            deg = jnp.maximum(deg, 1.0)
            w_e = (jnp.ones((e,), jnp.float32) if nrm is None
                   else nrm.astype(jnp.float32)) / deg[dst_idx]
            msg = q(xr[src][src_idx]) @ q(p['w_msg']) + q(ea) @ q(p['w_edge'])
            msg = q(msg * w_e[:, None])
            agg = jax.ops.segment_sum(msg, dst_idx, num_segments=nd)
            root = q(xr[dst]) @ q(p['w_root'])
            results.append(root + agg + p['b'][None, :])
        grouped = jnp.mean(jnp.stack(results, 0), axis=0)
        if model.sync_conv:
            new_dict[dst] = grouped
        else:
            xr[dst] = grouped
    return new_dict if model.sync_conv else xr


# ----------------------------------------------------------------------------
# Demo / correctness check
# ----------------------------------------------------------------------------
if __name__ == "__main__":
    key = jax.random.PRNGKey(0)
    H = 32          # hidden / feature dim (kept equal so sequential updates compose)
    FE = 8          # edge-attr dim
    N = {'a': 16, 'b': 8}
    E = {('a', 'to', 'b'): 32, ('b', 'to', 'a'): 24, ('a', 'to', 'a'): 16}

    key, ka, kb = jax.random.split(key, 3)
    x_dict = {
        'a': jax.random.normal(ka, (N['a'], H), jnp.float32),
        'b': jax.random.normal(kb, (N['b'], H), jnp.float32),
    }
    batch_dict = {t: jnp.zeros((N[t],), jnp.int32) for t in N}

    edge_index_dict, edge_attr_dict, norm_dict = {}, {}, {}
    for et, ne in E.items():
        src_t, _, dst_t = et
        key, k1, k2, k3, k4 = jax.random.split(key, 5)
        edge_index_dict[et] = jnp.stack([
            jax.random.randint(k1, (ne,), 0, N[src_t]),
            jax.random.randint(k2, (ne,), 0, N[dst_t]),
        ])
        edge_attr_dict[et] = jax.random.normal(k3, (ne, FE), jnp.float32)
        # one edge type gets an explicit norm, the others None (Optional semantics)
        norm_dict[et] = (jax.random.uniform(k4, (ne,), jnp.float32) + 0.5
                         if et == ('a', 'to', 'b') else None)

    conv_sequence = [('a_b',), ('b_a', 'a_a')]
    key, kp = jax.random.split(key)
    model = HeteroConv(kp, feat_dims={'a': H, 'b': H}, edge_dim=FE, hidden=H,
                       conv_sequence=conv_sequence, sync_conv=False)

    out = model.forward(x_dict, batch_dict, edge_index_dict, edge_attr_dict,
                        norm_dict)
    out = {k: jax.block_until_ready(v) for k, v in out.items()}

    # strict check vs a reference that emulates the kernel's bf16 numerics
    ref_bf16 = _forward_reference(model, x_dict, edge_index_dict,
                                  edge_attr_dict, norm_dict, emulate_bf16=True)
    # loose check vs the pure-f32 module semantics (bf16 MXU operands)
    ref_f32 = _forward_reference(model, x_dict, edge_index_dict,
                                 edge_attr_dict, norm_dict, emulate_bf16=False)
    for t in N:
        assert out[t].shape == (N[t], H)
        assert jnp.allclose(out[t], ref_bf16[t], atol=3e-3, rtol=3e-3), \
            f"mismatch vs bf16-emulated reference for node type {t}"
        assert jnp.allclose(out[t], ref_f32[t], atol=1e-1, rtol=1e-1), \
            f"mismatch vs f32 reference for node type {t}"

    print("KERNEL_OK")
</pallas_src>

<mosaic_0001>
module attributes {stable_mosaic.version = 11 : i64} {
  func.func @_msg_kernel(%arg0: i32, %arg1: memref<32x32xbf16, #tpu.memory_space<vmem>>, %arg2: memref<32x8xbf16, #tpu.memory_space<vmem>>, %arg3: memref<32x1xf32, #tpu.memory_space<vmem>>, %arg4: memref<32x128xbf16, #tpu.memory_space<vmem>>, %arg5: memref<8x128xbf16, #tpu.memory_space<vmem>>, %arg6: memref<32x128xbf16, #tpu.memory_space<vmem>>) attributes {dimension_semantics = [#tpu.dimension_semantics<parallel>], iteration_bounds = array<i64: 1>, scalar_prefetch = 0 : i64, scratch_operands = 0 : i64, tpu.core_type = #tpu.core_type<tc>, window_params = [{transform_indices = @transform_0, window_bounds = array<i64: 32, 32>}, {transform_indices = @transform_1, window_bounds = array<i64: 32, 8>}, {transform_indices = @transform_2, window_bounds = array<i64: 32, 1>}, {pipeline_mode = #tpu.pipeline_mode<synchronous>, transform_indices = @transform_3, window_bounds = array<i64: 32, 128>}, {pipeline_mode = #tpu.pipeline_mode<synchronous>, transform_indices = @transform_4, window_bounds = array<i64: 8, 128>}, {transform_indices = @transform_5, window_bounds = array<i64: 32, 128>}]} {
    %c0 = arith.constant 0 : index
    %c0_0 = arith.constant 0 : index
    %0 = vector.load %arg1[%c0, %c0_0] : memref<32x32xbf16, #tpu.memory_space<vmem>>, vector<32x32xbf16>
    %c0_1 = arith.constant 0 : index
    %c0_2 = arith.constant 0 : index
    %1 = vector.load %arg4[%c0_1, %c0_2] : memref<32x128xbf16, #tpu.memory_space<vmem>>, vector<32x128xbf16>
    %cst = arith.constant dense<0.000000e+00> : vector<32x128xf32>
    %2 = tpu.matmul %0, %1, %cst {dimension_numbers = #tpu.dot_dimension_numbers<[1], [0], [0], [1], [0, 0, 1, 1], [], []>} : vector<32x32xbf16>, vector<32x128xbf16>, vector<32x128xf32> -> vector<32x128xf32>
    %c0_3 = arith.constant 0 : index
    %c0_4 = arith.constant 0 : index
    %3 = vector.load %arg2[%c0_3, %c0_4] : memref<32x8xbf16, #tpu.memory_space<vmem>>, vector<32x8xbf16>
    %c0_5 = arith.constant 0 : index
    %c0_6 = arith.constant 0 : index
    %4 = vector.load %arg5[%c0_5, %c0_6] : memref<8x128xbf16, #tpu.memory_space<vmem>>, vector<8x128xbf16>
    %cst_7 = arith.constant dense<0.000000e+00> : vector<32x128xf32>
    %5 = tpu.matmul %3, %4, %cst_7 {dimension_numbers = #tpu.dot_dimension_numbers<[1], [0], [0], [1], [0, 0, 1, 1], [], []>} : vector<32x8xbf16>, vector<8x128xbf16>, vector<32x128xf32> -> vector<32x128xf32>
    %6 = arith.addf %2, %5 : vector<32x128xf32>
    %c0_8 = arith.constant 0 : index
    %c0_9 = arith.constant 0 : index
    %7 = vector.load %arg3[%c0_8, %c0_9] : memref<32x1xf32, #tpu.memory_space<vmem>>, vector<32x1xf32>
    %8 = vector.broadcast %7 : vector<32x1xf32> to vector<32x128xf32>
    %9 = arith.mulf %6, %8 : vector<32x128xf32>
    %10 = arith.truncf %9 : vector<32x128xf32> to vector<32x128xbf16>
    %c0_10 = arith.constant 0 : index
    %c0_11 = arith.constant 0 : index
    %11 = vector.load %arg6[%c0_10, %c0_11] : memref<32x128xbf16, #tpu.memory_space<vmem>>, vector<32x128xbf16>
    tpu.vector_store %arg6[%c0_10, %c0_11], %10 {strides = array<i32>} : memref<32x128xbf16, #tpu.memory_space<vmem>>, vector<32x128xbf16>,
    return
  }
  func.func @transform_0(%arg0: i32) -> (i32, i32) {
    %c0_i32 = arith.constant 0 : i32
    %c0_i32_0 = arith.constant 0 : i32
    return %arg0, %c0_i32 : i32, i32
  }
  func.func @transform_1(%arg0: i32) -> (i32, i32) {
    %c0_i32 = arith.constant 0 : i32
    %c0_i32_0 = arith.constant 0 : i32
    return %arg0, %c0_i32 : i32, i32
  }
  func.func @transform_2(%arg0: i32) -> (i32, i32) {
    %c0_i32 = arith.constant 0 : i32
    %c0_i32_0 = arith.constant 0 : i32
    return %arg0, %c0_i32 : i32, i32
  }
  func.func @transform_3(%arg0: i32) -> (i32, i32) {
    %c0_i32 = arith.constant 0 : i32
    %c0_i32_0 = arith.constant 0 : i32
    %c0_i32_1 = arith.constant 0 : i32
    return %c0_i32, %c0_i32_0 : i32, i32
  }
  func.func @transform_4(%arg0: i32) -> (i32, i32) {
    %c0_i32 = arith.constant 0 : i32
    %c0_i32_0 = arith.constant 0 : i32
    %c0_i32_1 = arith.constant 0 : i32
    return %c0_i32, %c0_i32_0 : i32, i32
  }
  func.func @transform_5(%arg0: i32) -> (i32, i32) {
    %c0_i32 = arith.constant 0 : i32
    %c0_i32_0 = arith.constant 0 : i32
    return %arg0, %c0_i32 : i32, i32
  }
}

</mosaic_0001>

<llo_original>
// kernel: tpu_custom_call.1
$region0: #{tpu_custom_call.1}
  #allocation0 [shape = 'u32[]', space=smem, size = 0x4, offset = 0x4, fixed_abs, tag = 'smem constant byte address 0x4 - core index']
  #allocation1 [shape = 'u32[144,128]{1,0:T(1,128)}', space=vmem, size = 0x12000, scoped, tag = 'internal scratch']
  %s0 = inlined_call_operand.vmem [shape: bf16[32,32], index: 0, kind: input, shape index: {}]
  %s1 = inlined_call_operand.vmem [shape: bf16[32,8], index: 1, kind: input, shape index: {}]
  %s2 = inlined_call_operand.vmem [shape: f32[32,1], index: 2, kind: input, shape index: {}]
  %s3 = inlined_call_operand.vmem [shape: bf16[32,128], index: 3, kind: input, shape index: {}]
  %s4 = inlined_call_operand.vmem [shape: bf16[8,128], index: 4, kind: input, shape index: {}]
  %s5 = inlined_call_operand.hbm [shape: bf16[32,128], index: 5, kind: output, shape index: {}]
  %s6 = sld [smem:[#allocation0]]
  $region30: #{tpu_custom_call.1} parent=0
    _
  %s8 = ssub.s32 1, %s6
  %s9 = scalar_select 0, %s8, %s6
  $region1: #{tpu_custom_call.1} parent=0
    #allocation2 [shape = 'u8[8192]{0}', space=vmem, size = 0x2000, scoped, tag = 'output window, operand 0, single buffered']
    #allocation3 [shape = 's32[1]{0}', space=sflag, size = 0x4, scoped, tag = 'scoped memory for tpu_custom_call.1']
    %10 = vsyncpa [#allocation3], 0
    // Predicated region
    $region2: #{tpu_custom_call.1} parent=1 // pred_check
      _
    $region3: #{tpu_custom_call.1} parent=1 // pred_check_branch
      %12 = sbr.rel (0) target = $region5
    $region4: #{tpu_custom_call.1} parent=1 // pred_region
      _
    $region5: #{tpu_custom_call.1} parent=1 // pred_fallthru
      _
    // Predicated region
    $region6: #{tpu_custom_call.1} parent=1 // pred_check
      _
    $region7: #{tpu_custom_call.1} parent=1 // pred_check_branch
      %14 = sbr.rel (0) target = $region9
    $region8: #{tpu_custom_call.1} parent=1 // pred_region
      _
    $region9: #{tpu_custom_call.1} parent=1 // pred_fallthru
      _
    // Predicated region
    $region10: #{tpu_custom_call.1} parent=1 // pred_check
      _
    $region11: #{tpu_custom_call.1} parent=1 // pred_check_branch
      %16 = sbr.rel (0) target = $region13
    $region12: #{tpu_custom_call.1} parent=1 // pred_region
      _
    $region13: #{tpu_custom_call.1} parent=1 // pred_fallthru
      _
    // Predicated region
    $region14: #{tpu_custom_call.1} parent=1 // pred_check
      _
    $region15: #{tpu_custom_call.1} parent=1 // pred_check_branch
      %18 = sbr.rel (0) target = $region17
    $region16: #{tpu_custom_call.1} parent=1 // pred_region
      _
    $region17: #{tpu_custom_call.1} parent=1 // pred_fallthru
      _
    // Predicated region
    $region18: #{tpu_custom_call.1} parent=1 // pred_check
      _
    $region19: #{tpu_custom_call.1} parent=1 // pred_check_branch
      %20 = sbr.rel (0) target = $region21
    $region20: #{tpu_custom_call.1} parent=1 // pred_region
      _
    $region21: #{tpu_custom_call.1} parent=1 // pred_fallthru
      _
    %v22 = vld [vmem:[%s0] sm:$0xf]
    %v23 = vld [vmem:[%s0 + $0x4] sm:$0xf]
    %v24 = vld [vmem:[%s0 + $0x8] sm:$0xf]
    %v25 = vld [vmem:[%s0 + $0xc] sm:$0xf]
    %v26 = vld [vmem:[%s3] sm:$0xf]
    %v27 = vld [vmem:[%s3 + $0x4] sm:$0xf]
    %v28 = vld [vmem:[%s3 + $0x8] sm:$0xf]
    %v29 = vld [vmem:[%s3 + $0xc] sm:$0xf]
    %v30 = vld [vmem:[%s1] sm:$0xf]
    %v31 = vld [vmem:[%s1 + $0x4] sm:$0xf]
    %v32 = vld [vmem:[%s1 + $0x8] sm:$0xf]
    %v33 = vld [vmem:[%s1 + $0xc] sm:$0xf]
    %v34 = vld [vmem:[%s4] sm:$0xf]
    %v39 = vunpack.c.l.b16 %v30
    %v40 = vunpack.c.l.b16 %v31
    %v41 = vunpack.c.l.b16 %v32
    %v42 = vunpack.c.l.b16 %v33
    %v43 = vpack.c.b16 %v40, %v39
    %v44 = vpack.c.b16 %v42, %v41
    %vm45 = vcmask 64512
    %v47 = vsel %vm45, %v43, 0
    %v50 = vsel %vm45, %v44, 0
    %vm52 = vcmask 1043456
    %v54 = vsel %vm52, %v34, 0
    %56 = vmatprep.subr.bf16.mxu0 0
    %57 = vmatpush1.bf16.msra.mxu0 %v54
    %58 = vmatprep.subr.bf16.mxu0 0
    %59 = vmatpush1.bf16.msra.mxu0 0
    %60 = vmatprep.subr.bf16.mxu0 0
    %61 = vmatpush1.bf16.msra.mxu0 0
    %62 = vmatprep.subr.bf16.mxu0 0
    %63 = vmatpush1.bf16.msra.mxu0 0
    %64 = vmatprep.subr.bf16.mxu0 0
    %65 = vmatpush1.bf16.msra.mxu0 0
    %66 = vmatprep.subr.bf16.mxu0 0
    %67 = vmatpush1.bf16.msra.mxu0 0
    %68 = vmatprep.subr.bf16.mxu0 0
    %69 = vmatpush1.bf16.msra.mxu0 0
    %70 = vmatprep.subr.bf16.mxu0 0
    %71 = vmatpush1.bf16.msra.mxu0 0
    %72 = vmatprep.subr.bf16.mxu0 0
    %73 = vmatpush1.bf16.msra.mxu0 0
    %74 = vmatprep.subr.bf16.mxu0 0
    %75 = vmatpush1.bf16.msra.mxu0 0
    %76 = vmatprep.subr.bf16.mxu0 0
    %77 = vmatpush1.bf16.msra.mxu0 0
    %78 = vmatprep.subr.bf16.mxu0 0
    %79 = vmatpush1.bf16.msra.mxu0 0
    %80 = vmatprep.subr.bf16.mxu0 0
    %81 = vmatpush1.bf16.msra.mxu0 0
    %82 = vmatprep.subr.bf16.mxu0 0
    %83 = vmatpush1.bf16.msra.mxu0 0
    %84 = vmatprep.subr.bf16.mxu0 0
    %85 = vmatpush1.bf16.msra.mxu0 0
    %86 = vmatprep.subr.bf16.mxu0 0
    %87 = vmatpush1.bf16.msra.mxu0 0
    %88 = vmatprep.mubr.bf16.mxu0 0
    %89 = vmatmul.mubr.bf16.gmra.mrb[0].mxu0 %v47
    %v90 = vpop.f32.mrb[0].mxu0
    %v91 = vadd.f32 0.0, %v90
    %v92 = vpop.f32.mrb[0].mxu0
    %v93 = vpop.f32.mrb[0].mxu0
    %v94 = vadd.f32 0.0, %v93
    %v95 = vpop.f32.mrb[0].mxu0
    %96 = vmatprep.mubr.bf16.mxu0 0
    %97 = vmatmul.mubr.bf16.gmra.mrb[0].mxu0 %v50
    %v98 = vpop.f32.mrb[0].mxu0
    %v99 = vadd.f32 0.0, %v98
    %v100 = vpop.f32.mrb[0].mxu0
    %v101 = vpop.f32.mrb[0].mxu0
    %v102 = vadd.f32 0.0, %v101
    %v103 = vpop.f32.mrb[0].mxu0
    %104 = vdwg.mxu0
    %v109 = vunpack.c.l.b16 %v22
    %v110 = vunpack.c.l.b16 %v23
    %v111 = vunpack.c.l.b16 %v24
    %v112 = vunpack.c.l.b16 %v25
    %v113 = vpack.c.b16 %v110, %v109
    %v114 = vpack.c.b16 %v112, %v111
    %v119 = vunpack.c.l.b16 %v26
    %v120 = vunpack.c.l.b16 %v27
    %v121 = vunpack.c.l.b16 %v28
    %v122 = vunpack.c.l.b16 %v29
    %v123 = vpack.c.b16 %v120, %v119
    %v124 = vpack.c.b16 %v122, %v121
    %vm127 = vcmask 261120
    %v129 = vsel %vm127, %v113, 0
    %v132 = vsel %vm127, %v114, 0
    %134 = vmatprep.subr.bf16.mxu0 0
    %135 = vmatpush1.bf16.msra.mxu0 %v123
    %136 = vmatprep.subr.bf16.mxu0 0
    %137 = vmatpush1.bf16.msra.mxu0 %v124
    %138 = vmatprep.subr.bf16.mxu0 0
    %139 = vmatpush1.bf16.msra.mxu0 0
    %140 = vmatprep.subr.bf16.mxu0 0
    %141 = vmatpush1.bf16.msra.mxu0 0
    %142 = vmatprep.subr.bf16.mxu0 0
    %143 = vmatpush1.bf16.msra.mxu0 0
    %144 = vmatprep.subr.bf16.mxu0 0
    %145 = vmatpush1.bf16.msra.mxu0 0
    %146 = vmatprep.subr.bf16.mxu0 0
    %147 = vmatpush1.bf16.msra.mxu0 0
    %148 = vmatprep.subr.bf16.mxu0 0
    %149 = vmatpush1.bf16.msra.mxu0 0
    %150 = vmatprep.subr.bf16.mxu0 0
    %151 = vmatpush1.bf16.msra.mxu0 0
    %152 = vmatprep.subr.bf16.mxu0 0
    %153 = vmatpush1.bf16.msra.mxu0 0
    %154 = vmatprep.subr.bf16.mxu0 0
    %155 = vmatpush1.bf16.msra.mxu0 0
    %156 = vmatprep.subr.bf16.mxu0 0
    %157 = vmatpush1.bf16.msra.mxu0 0
    %158 = vmatprep.subr.bf16.mxu0 0
    %159 = vmatpush1.bf16.msra.mxu0 0
    %160 = vmatprep.subr.bf16.mxu0 0
    %161 = vmatpush1.bf16.msra.mxu0 0
    %162 = vmatprep.subr.bf16.mxu0 0
    %163 = vmatpush1.bf16.msra.mxu0 0
    %164 = vmatprep.subr.bf16.mxu0 0
    %165 = vmatpush1.bf16.msra.mxu0 0
    %166 = vmatprep.mubr.bf16.mxu0 0
    %167 = vmatmul.mubr.bf16.gmra.mrb[0].mxu0 %v129
    %v168 = vpop.f32.mrb[0].mxu0
    %v169 = vadd.f32 %v91, %v168
    %v170 = vpop.f32.mrb[0].mxu0
    %v171 = vpop.f32.mrb[0].mxu0
    %v172 = vadd.f32 %v94, %v171
    %v173 = vpop.f32.mrb[0].mxu0
    %174 = vmatprep.mubr.bf16.mxu0 0
    %175 = vmatmul.mubr.bf16.gmra.mrb[0].mxu0 %v132
    %v176 = vpop.f32.mrb[0].mxu0
    %v177 = vadd.f32 %v99, %v176
    %v178 = vpop.f32.mrb[0].mxu0
    %v179 = vpop.f32.mrb[0].mxu0
    %v180 = vadd.f32 %v102, %v179
    %v181 = vpop.f32.mrb[0].mxu0
    %182 = vdwg.mxu0
    %v183 = vld [vmem:[%s2] sm:$0xff]
    %v184 = vld [vmem:[%s2 + $0x8] sm:$0xff]
    %v185 = vld [vmem:[%s2 + $0x10] sm:$0xff]
    %v186 = vld [vmem:[%s2 + $0x18] sm:$0xff]
    %188 = vset.pattern.permute.xlu0 0
    %189 = vperm.xlu0 %188, %v183
    %v190 = vpop.permute.xlu0 %189
    %193 = vset.pattern.permute.xlu0 0
    %194 = vperm.xlu0 %193, %v184
    %v195 = vpop.permute.xlu0 %194
    %198 = vset.pattern.permute.xlu0 0
    %199 = vperm.xlu0 %198, %v185
    %v200 = vpop.permute.xlu0 %199
    %203 = vset.pattern.permute.xlu0 0
    %204 = vperm.xlu0 %203, %v186
    %v205 = vpop.permute.xlu0 %204
    %v207 = vmul.f32 %v169, %v190
    %v208 = vmul.f32 %v172, %v195
    %v209 = vmul.f32 %v177, %v200
    %v210 = vmul.f32 %v180, %v205
    %v211 = vpack.c.bf16 %v208, %v207
    %v212 = vpack.c.bf16 %v210, %v209
    %v215 = vunpack.c.l.b16 %v211
    %v216 = vunpack.c.h.b16 %v211
    %v217 = vunpack.c.l.b16 %v212
    %v218 = vunpack.c.h.b16 %v212
    %v219 = vpack.c.b16 %v215, %v215
    %v220 = vpack.c.b16 %v216, %v216
    %v221 = vpack.c.b16 %v217, %v217
    %v222 = vpack.c.b16 %v218, %v218
    %227 = vst [vmem:[#allocation2] sm:$0xf] %v219
    %228 = vst [vmem:[#allocation2 + $0x4] sm:$0xf] %v220
    %229 = vst [vmem:[#allocation2 + $0x8] sm:$0xf] %v221
    %230 = vst [vmem:[#allocation2 + $0xc] sm:$0xf] %v222
    // Predicated region
    $region22: #{tpu_custom_call.1} parent=1 // pred_check
      _
    $region23: #{tpu_custom_call.1} parent=1 // pred_check_branch
      %232 = sbr.rel (0) target = $region25
    $region24: #{tpu_custom_call.1} parent=1 // pred_region
      %s234 = ssub.s32 256, 256
      %235 = vsyncadd [#allocation3], %s234
      %s236 = sshll.u32 [#allocation2], 4
      %s237 = int_to_ptr.vmem [resolvable:$true] %s236
      %242 = dma.vmem_to_hbm [thread:$0]  %s237, 256, %s5, [#allocation3], 64, 64, 4
    $region25: #{tpu_custom_call.1} parent=1 // pred_fallthru
      _
    // Predicated region
    $region26: #{tpu_custom_call.1} parent=1 // pred_check
      _
    $region27: #{tpu_custom_call.1} parent=1 // pred_check_branch
      %244 = sbr.rel (0) target = $region29
    $region28: #{tpu_custom_call.1} parent=1 // pred_region
      %245 = dma.done [#allocation3], 256
    $region29: #{tpu_custom_call.1} parent=1 // pred_fallthru
      _
    %246 = vsyncpa [#allocation3], 1

</llo_original>
